<compile_context>
chip_gen: v7x
topology: tpu7x:2x2x1
jax: 0.10.0
libtpu: 0.0.40
codegen_flags: <defaults>
</compile_context>

<pallas_src>
import functools

import jax
import jax.numpy as jnp
from jax import lax
from jax.experimental import pallas as pl
from jax.experimental.pallas import tpu as pltpu


def _round_up(x: int, m: int) -> int:
    return (x + m - 1) // m * m


def _vmem_capacity_bytes() -> int:
    try:
        info = pltpu.get_tpu_info()
        cap = getattr(info, "vmem_capacity_bytes", None)
        if cap:
            return int(cap)
    except Exception:
        pass
    return 64 * 1024 * 1024  # conservative default (v7x-sized VMEM)


def _pick_row_tile(n: int, sublane: int, max_tile: int) -> int:
    """Largest row tile with <=15% pad waste; prefer >=2 tiles (v7x megacore)."""
    cap = max(max_tile, sublane)
    cands = [c for c in (512, 256, 128, 64, 32, 16, 8)
             if c % sublane == 0 and c <= cap]
    if not cands:
        cands = [sublane]

    def key(c):
        n_p = _round_up(max(n, 1), c)
        waste = (n_p - n) / n_p
        return (waste > 0.15,                 # prefer <=15% padded rows
                n_p if waste > 0.15 else 0,   # otherwise minimize padded rows
                0 if n_p // c >= 2 else 1,    # prefer >=2 row tiles (2 TCs)
                -c)                           # then prefer bigger tiles
    return min(cands, key=key)


def _pick_chunk(dim_p128: int, tile: int) -> int:
    """Chunk (multiple of 128) for a 128-padded dim.  Pads UP instead of
    shrinking; keeps the chunk >=256 (MXU depth) unless the caller asked for
    a smaller tile."""
    tile = max(128, tile)
    if dim_p128 <= tile:
        return dim_p128
    lo = 256 if tile >= 256 else 128
    cands = range(lo, tile + 1, 128)
    return min(cands, key=lambda c: (_round_up(dim_p128, c) - dim_p128, -c))


# --------------------------------------------------------------------------- #
# Kernels
# --------------------------------------------------------------------------- #
def _mlp_resident_kernel(x_ref, w1_ref, b1_ref, w2_ref, b2_ref, o_ref):
    """1-D grid over row tiles; weights VMEM-resident (constant index_map);
    hidden dim chunked with an in-kernel fori_loop.  w1/b1/w2 are pre-reshaped
    in the wrapper to (n_chunks, ...) so each chunk is a leading-axis index."""
    x = x_ref[...]
    tm, d_out_p = o_ref.shape
    n_chunks = w1_ref.shape[0]

    def body(j, acc):
        # Layer 1 on hidden chunk j (MXU) + bias/ReLU in f32 (VPU).
        h = jnp.dot(x, w1_ref[j], preferred_element_type=jnp.float32)
        h = jnp.maximum(h + b1_ref[j], 0.0).astype(w2_ref.dtype)
        # Layer 2 partial product, f32 accumulation.
        return acc + jnp.dot(h, w2_ref[j], preferred_element_type=jnp.float32)

    acc = lax.fori_loop(0, n_chunks, body,
                        jnp.zeros((tm, d_out_p), jnp.float32),
                        unroll=n_chunks <= 4)
    o_ref[...] = (acc + b2_ref[...]).astype(o_ref.dtype)


def _mlp_stream_kernel(x_ref, w1_ref, b1_ref, w2_ref, b2_ref, o_ref, *scratch):
    """3-D grid (rows, d_out tiles, hidden chunks); reduction over last axis.
    Accumulates directly into the resident f32 output block when no scratch
    was allocated (saves VMEM, drops the final acc->o copy)."""
    acc_ref = scratch[0] if scratch else o_ref
    j = pl.program_id(2)

    @pl.when(j == 0)
    def _init():
        acc_ref[...] = jnp.zeros_like(acc_ref)

    h = jnp.dot(x_ref[...], w1_ref[...], preferred_element_type=jnp.float32)
    h = jnp.maximum(h + b1_ref[...], 0.0).astype(w2_ref.dtype)
    acc_ref[...] += jnp.dot(h, w2_ref[...], preferred_element_type=jnp.float32)

    @pl.when(j == pl.num_programs(2) - 1)
    def _finalize():
        o_ref[...] = (acc_ref[...] + b2_ref[...]).astype(o_ref.dtype)


# --------------------------------------------------------------------------- #
# Wrapper
# --------------------------------------------------------------------------- #
@functools.partial(
    jax.jit,
    static_argnames=("tile_m", "tile_h", "tile_n", "use_bf16", "force_stream"))
def mlp_pallas(x, w1, b1, w2, b2, *, tile_m: int = 512, tile_h: int = 512,
               tile_n: int = 512, use_bf16: bool = False,
               force_stream: bool = False):
    n, d_in = x.shape
    h_dim = w1.shape[1]
    d_out = w2.shape[1]
    out_dtype = x.dtype

    in_dtype = jnp.bfloat16 if use_bf16 else x.dtype
    bytes_in = jnp.dtype(in_dtype).itemsize
    bytes_out = jnp.dtype(out_dtype).itemsize
    sublane = {4: 8, 2: 16, 1: 32}.get(bytes_in, 8)

    # ---- lane-dense 128-padding of feature dims (zero pad is exact) ----------
    d_in_p = _round_up(d_in, 128)
    h_p128 = _round_up(h_dim, 128)
    d_out_p128 = _round_up(d_out, 128)

    # ---- tiles ----------------------------------------------------------------
    tm = _pick_row_tile(n, sublane, tile_m)
    n_p = _round_up(n, tm)
    n_row = n_p // tm

    th = _pick_chunk(h_p128, tile_h)
    h_p = _round_up(h_p128, th)          # pad H UP to a multiple of th
    n_hid = h_p // th

    tn = _pick_chunk(d_out_p128, tile_n)
    d_out_pB = _round_up(d_out_p128, tn)

    # ---- generation-aware VMEM budget -----------------------------------------
    cap = _vmem_capacity_bytes()
    vmem_limit = int(max(32 * 1024 * 1024,
                         min(0.8 * cap, cap - 8 * 1024 * 1024)))

    # Conservative resident-path estimate (inputs/outputs counted double-buffered).
    resident_bytes = (
        2 * tm * d_in_p * bytes_in          # x row tile
        + 2 * tm * d_out_p128 * bytes_out   # out row tile
        + 2 * d_in_p * h_p * bytes_in       # w1 (full, resident)
        + 2 * h_p * d_out_p128 * bytes_in   # w2 (full, resident)
        + 2 * (h_p + d_out_p128) * 4        # biases (f32)
        + tm * d_out_p128 * 4               # fori_loop accumulator
        + tm * th * 4                       # hidden chunk temp
    )
    use_resident = (not force_stream) and resident_bytes <= int(0.85 * vmem_limit)
    d_out_p = d_out_p128 if use_resident else d_out_pB

    # ---- pad / cast operands ---------------------------------------------------
    x_p = jnp.pad(x.astype(in_dtype), ((0, n_p - n), (0, d_in_p - d_in)))
    w1_p = jnp.pad(w1.astype(in_dtype), ((0, d_in_p - d_in), (0, h_p - h_dim)))
    w2_p = jnp.pad(w2.astype(in_dtype), ((0, h_p - h_dim), (0, d_out_p - d_out)))
    b1_p = jnp.pad(b1.astype(jnp.float32).reshape(1, h_dim),
                   ((0, 0), (0, h_p - h_dim)))
    b2_p = jnp.pad(b2.astype(jnp.float32).reshape(1, d_out),
                   ((0, 0), (0, d_out_p - d_out)))

    if use_resident:
        # Chunk the hidden dim along a leading axis so the kernel indexes chunks
        # with a cheap leading-axis dynamic index.
        w1_r = w1_p.reshape(d_in_p, n_hid, th).transpose(1, 0, 2)   # (nh, Din, th)
        b1_r = b1_p.reshape(1, n_hid, th).transpose(1, 0, 2)        # (nh, 1, th)
        w2_r = w2_p.reshape(n_hid, th, d_out_p)                     # (nh, th, Dout)

        flops = 2 * n_p * (d_in_p * h_p + h_p * d_out_p)
        bytes_accessed = (n_p * d_in_p * bytes_in
                          + d_in_p * h_p * bytes_in
                          + h_p * d_out_p * bytes_in
                          + 4 * (h_p + d_out_p)
                          + n_p * d_out_p * bytes_out)

        out_p = pl.pallas_call(
            _mlp_resident_kernel,
            out_shape=jax.ShapeDtypeStruct((n_p, d_out_p), out_dtype),
            grid_spec=pltpu.PrefetchScalarGridSpec(
                num_scalar_prefetch=0,
                grid=(n_row,),
                in_specs=[
                    pl.BlockSpec((tm, d_in_p), lambda i: (i, 0)),          # x
                    pl.BlockSpec((n_hid, d_in_p, th), lambda i: (0, 0, 0)),  # w1
                    pl.BlockSpec((n_hid, 1, th), lambda i: (0, 0, 0)),       # b1
                    pl.BlockSpec((n_hid, th, d_out_p), lambda i: (0, 0, 0)),  # w2
                    pl.BlockSpec((1, d_out_p), lambda i: (0, 0)),            # b2
                ],
                out_specs=pl.BlockSpec((tm, d_out_p), lambda i: (i, 0)),
            ),
            compiler_params=pltpu.CompilerParams(
                dimension_semantics=("parallel",),
                vmem_limit_bytes=vmem_limit,
            ),
            cost_estimate=pl.CostEstimate(
                flops=int(flops), transcendentals=0,
                bytes_accessed=int(bytes_accessed)),
        )(x_p, w1_r, b1_r, w2_r, b2_p)
    else:
        n_out = d_out_p // tn
        # Accumulate directly into the output block when it is f32.
        use_scratch = jnp.dtype(out_dtype) != jnp.dtype(jnp.float32)

        flops = 2 * n_p * d_in_p * h_p * n_out + 2 * n_p * h_p * d_out_p
        bytes_accessed = (n_p * d_in_p * bytes_in
                          + n_row * n_out * d_in_p * h_p * bytes_in   # w1 re-read
                          + n_row * h_p * d_out_p * bytes_in          # w2 re-read
                          + n_row * n_out * 4 * (h_p + d_out_p)
                          + n_p * d_out_p * bytes_out)

        out_p = pl.pallas_call(
            _mlp_stream_kernel,
            out_shape=jax.ShapeDtypeStruct((n_p, d_out_p), out_dtype),
            grid_spec=pltpu.PrefetchScalarGridSpec(
                num_scalar_prefetch=0,
                grid=(n_row, n_out, n_hid),
                in_specs=[
                    pl.BlockSpec((tm, d_in_p), lambda i, o, j: (i, 0)),   # x
                    pl.BlockSpec((d_in_p, th), lambda i, o, j: (0, j)),   # w1 chunk
                    pl.BlockSpec((1, th), lambda i, o, j: (0, j)),        # b1 chunk
                    pl.BlockSpec((th, tn), lambda i, o, j: (j, o)),       # w2 chunk
                    pl.BlockSpec((1, tn), lambda i, o, j: (0, o)),        # b2 tile
                ],
                out_specs=pl.BlockSpec((tm, tn), lambda i, o, j: (i, o)),
                scratch_shapes=(
                    [pltpu.VMEM((tm, tn), jnp.float32)] if use_scratch else []),
            ),
            compiler_params=pltpu.CompilerParams(
                dimension_semantics=("parallel", "parallel", "arbitrary"),
                vmem_limit_bytes=vmem_limit,
            ),
            cost_estimate=pl.CostEstimate(
                flops=int(flops), transcendentals=0,
                bytes_accessed=int(bytes_accessed)),
        )(x_p, w1_p, b1_p, w2_p, b2_p)

    # strip padding back to the logical shape
    return out_p[:n, :d_out]


if __name__ == "__main__":
    key = jax.random.PRNGKey(0)
    kx, k1, kb1, k2, kb2 = jax.random.split(key, 5)

    # Small but non-trivial shapes: exercise 128-padding, multi-chunk hidden dim
    # and (in the streaming test) multiple d_out tiles.
    N, D_IN, HIDDEN, D_OUT = 48, 96, 300, 200

    x = jax.random.normal(kx, (N, D_IN), dtype=jnp.float32)
    w1 = jax.random.normal(k1, (D_IN, HIDDEN), dtype=jnp.float32) * 0.1
    b1 = jax.random.normal(kb1, (HIDDEN,), dtype=jnp.float32) * 0.1
    w2 = jax.random.normal(k2, (HIDDEN, D_OUT), dtype=jnp.float32) * 0.1
    b2 = jax.random.normal(kb2, (D_OUT,), dtype=jnp.float32) * 0.1

    # High-precision pure-JAX reference.
    hid = jnp.maximum(
        jnp.dot(x, w1, precision=jax.lax.Precision.HIGHEST) + b1, 0.0)
    ref = jnp.dot(hid, w2, precision=jax.lax.Precision.HIGHEST) + b2

    # 1) Resident-weights path (f32), multi-chunk in-kernel hidden loop.
    out_res = jax.block_until_ready(mlp_pallas(x, w1, b1, w2, b2, tile_h=128))
    assert out_res.shape == (N, D_OUT)
    assert jnp.allclose(out_res, ref, atol=1e-2, rtol=1e-2)

    # 2) Streaming fallback (f32): 3-D grid, accumulates into the output block.
    out_str = jax.block_until_ready(
        mlp_pallas(x, w1, b1, w2, b2, tile_h=128, tile_n=128, force_stream=True))
    assert out_str.shape == (N, D_OUT)
    assert jnp.allclose(out_str, ref, atol=1e-2, rtol=1e-2)

    # 3) bf16 MXU path (f32 accumulation / epilogue): looser tolerance.
    out_bf = jax.block_until_ready(mlp_pallas(x, w1, b1, w2, b2, use_bf16=True))
    assert out_bf.shape == (N, D_OUT)
    assert jnp.allclose(out_bf, ref, atol=5e-2, rtol=5e-2)

    print("KERNEL_OK")
</pallas_src>

<mosaic_0001>
module attributes {stable_mosaic.version = 11 : i64} {
  func.func @_mlp_resident_kernel(%arg0: i32, %arg1: memref<16x128xf32, #tpu.memory_space<vmem>>, %arg2: memref<3x128x128xf32, #tpu.memory_space<vmem>>, %arg3: memref<3x1x128xf32, #tpu.memory_space<vmem>>, %arg4: memref<3x128x256xf32, #tpu.memory_space<vmem>>, %arg5: memref<1x256xf32, #tpu.memory_space<vmem>>, %arg6: memref<16x256xf32, #tpu.memory_space<vmem>>) attributes {dimension_semantics = [#tpu.dimension_semantics<parallel>], iteration_bounds = array<i64: 3>, scalar_prefetch = 0 : i64, scratch_operands = 0 : i64, tpu.core_type = #tpu.core_type<tc>, window_params = [{transform_indices = @transform_0, window_bounds = array<i64: 16, 128>}, {pipeline_mode = #tpu.pipeline_mode<synchronous>, transform_indices = @transform_1, window_bounds = array<i64: 3, 128, 128>}, {pipeline_mode = #tpu.pipeline_mode<synchronous>, transform_indices = @transform_2, window_bounds = array<i64: 3, 1, 128>}, {pipeline_mode = #tpu.pipeline_mode<synchronous>, transform_indices = @transform_3, window_bounds = array<i64: 3, 128, 256>}, {pipeline_mode = #tpu.pipeline_mode<synchronous>, transform_indices = @transform_4, window_bounds = array<i64: 1, 256>}, {transform_indices = @transform_5, window_bounds = array<i64: 16, 256>}]} {
    %c0 = arith.constant 0 : index
    %c0_0 = arith.constant 0 : index
    %0 = vector.load %arg1[%c0, %c0_0] : memref<16x128xf32, #tpu.memory_space<vmem>>, vector<16x128xf32>
    %cst = arith.constant 0.000000e+00 : f32
    %1 = vector.broadcast %cst : f32 to vector<16x256xf32>
    %c0_i32 = arith.constant 0 : i32
    %2 = arith.index_cast %c0_i32 : i32 to index
    %c0_1 = arith.constant 0 : index
    %c0_2 = arith.constant 0 : index
    %3 = vector.load %arg2[%2, %c0_1, %c0_2] : memref<3x128x128xf32, #tpu.memory_space<vmem>>, vector<1x128x128xf32>
    %4 = vector.shape_cast %3 : vector<1x128x128xf32> to vector<128x128xf32>
    %cst_3 = arith.constant dense<0.000000e+00> : vector<16x128xf32>
    %5 = tpu.matmul %0, %4, %cst_3 {dimension_numbers = #tpu.dot_dimension_numbers<[1], [0], [0], [1], [0, 0, 1, 1], [], []>} : vector<16x128xf32>, vector<128x128xf32>, vector<16x128xf32> -> vector<16x128xf32>
    %6 = arith.index_cast %c0_i32 : i32 to index
    %c0_4 = arith.constant 0 : index
    %c0_5 = arith.constant 0 : index
    %7 = vector.load %arg3[%6, %c0_4, %c0_5] : memref<3x1x128xf32, #tpu.memory_space<vmem>>, vector<1x1x128xf32>
    %8 = vector.shape_cast %7 : vector<1x1x128xf32> to vector<1x128xf32>
    %9 = vector.broadcast %8 : vector<1x128xf32> to vector<16x128xf32>
    %10 = arith.addf %5, %9 : vector<16x128xf32>
    %cst_6 = arith.constant 0.000000e+00 : f32
    %11 = vector.broadcast %cst_6 : f32 to vector<16x128xf32>
    %12 = arith.maximumf %10, %11 : vector<16x128xf32>
    %13 = arith.index_cast %c0_i32 : i32 to index
    %c0_7 = arith.constant 0 : index
    %c0_8 = arith.constant 0 : index
    %14 = vector.load %arg4[%13, %c0_7, %c0_8] : memref<3x128x256xf32, #tpu.memory_space<vmem>>, vector<1x128x256xf32>
    %15 = vector.shape_cast %14 : vector<1x128x256xf32> to vector<128x256xf32>
    %cst_9 = arith.constant dense<0.000000e+00> : vector<16x256xf32>
    %16 = tpu.matmul %12, %15, %cst_9 {dimension_numbers = #tpu.dot_dimension_numbers<[1], [0], [0], [1], [0, 0, 1, 1], [], []>} : vector<16x128xf32>, vector<128x256xf32>, vector<16x256xf32> -> vector<16x256xf32>
    %17 = arith.addf %1, %16 : vector<16x256xf32>
    %c1_i32 = arith.constant 1 : i32
    %18 = arith.index_cast %c1_i32 : i32 to index
    %c0_10 = arith.constant 0 : index
    %c0_11 = arith.constant 0 : index
    %19 = vector.load %arg2[%18, %c0_10, %c0_11] : memref<3x128x128xf32, #tpu.memory_space<vmem>>, vector<1x128x128xf32>
    %20 = vector.shape_cast %19 : vector<1x128x128xf32> to vector<128x128xf32>
    %cst_12 = arith.constant dense<0.000000e+00> : vector<16x128xf32>
    %21 = tpu.matmul %0, %20, %cst_12 {dimension_numbers = #tpu.dot_dimension_numbers<[1], [0], [0], [1], [0, 0, 1, 1], [], []>} : vector<16x128xf32>, vector<128x128xf32>, vector<16x128xf32> -> vector<16x128xf32>
    %22 = arith.index_cast %c1_i32 : i32 to index
    %c0_13 = arith.constant 0 : index
    %c0_14 = arith.constant 0 : index
    %23 = vector.load %arg3[%22, %c0_13, %c0_14] : memref<3x1x128xf32, #tpu.memory_space<vmem>>, vector<1x1x128xf32>
    %24 = vector.shape_cast %23 : vector<1x1x128xf32> to vector<1x128xf32>
    %25 = vector.broadcast %24 : vector<1x128xf32> to vector<16x128xf32>
    %26 = arith.addf %21, %25 : vector<16x128xf32>
    %cst_15 = arith.constant 0.000000e+00 : f32
    %27 = vector.broadcast %cst_15 : f32 to vector<16x128xf32>
    %28 = arith.maximumf %26, %27 : vector<16x128xf32>
    %29 = arith.index_cast %c1_i32 : i32 to index
    %c0_16 = arith.constant 0 : index
    %c0_17 = arith.constant 0 : index
    %30 = vector.load %arg4[%29, %c0_16, %c0_17] : memref<3x128x256xf32, #tpu.memory_space<vmem>>, vector<1x128x256xf32>
    %31 = vector.shape_cast %30 : vector<1x128x256xf32> to vector<128x256xf32>
    %cst_18 = arith.constant dense<0.000000e+00> : vector<16x256xf32>
    %32 = tpu.matmul %28, %31, %cst_18 {dimension_numbers = #tpu.dot_dimension_numbers<[1], [0], [0], [1], [0, 0, 1, 1], [], []>} : vector<16x128xf32>, vector<128x256xf32>, vector<16x256xf32> -> vector<16x256xf32>
    %33 = arith.addf %17, %32 : vector<16x256xf32>
    %c2_i32 = arith.constant 2 : i32
    %34 = arith.index_cast %c2_i32 : i32 to index
    %c0_19 = arith.constant 0 : index
    %c0_20 = arith.constant 0 : index
    %35 = vector.load %arg2[%34, %c0_19, %c0_20] : memref<3x128x128xf32, #tpu.memory_space<vmem>>, vector<1x128x128xf32>
    %36 = vector.shape_cast %35 : vector<1x128x128xf32> to vector<128x128xf32>
    %cst_21 = arith.constant dense<0.000000e+00> : vector<16x128xf32>
    %37 = tpu.matmul %0, %36, %cst_21 {dimension_numbers = #tpu.dot_dimension_numbers<[1], [0], [0], [1], [0, 0, 1, 1], [], []>} : vector<16x128xf32>, vector<128x128xf32>, vector<16x128xf32> -> vector<16x128xf32>
    %38 = arith.index_cast %c2_i32 : i32 to index
    %c0_22 = arith.constant 0 : index
    %c0_23 = arith.constant 0 : index
    %39 = vector.load %arg3[%38, %c0_22, %c0_23] : memref<3x1x128xf32, #tpu.memory_space<vmem>>, vector<1x1x128xf32>
    %40 = vector.shape_cast %39 : vector<1x1x128xf32> to vector<1x128xf32>
    %41 = vector.broadcast %40 : vector<1x128xf32> to vector<16x128xf32>
    %42 = arith.addf %37, %41 : vector<16x128xf32>
    %cst_24 = arith.constant 0.000000e+00 : f32
    %43 = vector.broadcast %cst_24 : f32 to vector<16x128xf32>
    %44 = arith.maximumf %42, %43 : vector<16x128xf32>
    %45 = arith.index_cast %c2_i32 : i32 to index
    %c0_25 = arith.constant 0 : index
    %c0_26 = arith.constant 0 : index
    %46 = vector.load %arg4[%45, %c0_25, %c0_26] : memref<3x128x256xf32, #tpu.memory_space<vmem>>, vector<1x128x256xf32>
    %47 = vector.shape_cast %46 : vector<1x128x256xf32> to vector<128x256xf32>
    %cst_27 = arith.constant dense<0.000000e+00> : vector<16x256xf32>
    %48 = tpu.matmul %44, %47, %cst_27 {dimension_numbers = #tpu.dot_dimension_numbers<[1], [0], [0], [1], [0, 0, 1, 1], [], []>} : vector<16x128xf32>, vector<128x256xf32>, vector<16x256xf32> -> vector<16x256xf32>
    %49 = arith.addf %33, %48 : vector<16x256xf32>
    %c3_i32 = arith.constant 3 : i32
    %c0_28 = arith.constant 0 : index
    %c0_29 = arith.constant 0 : index
    %50 = vector.load %arg5[%c0_28, %c0_29] : memref<1x256xf32, #tpu.memory_space<vmem>>, vector<1x256xf32>
    %51 = vector.broadcast %50 : vector<1x256xf32> to vector<16x256xf32>
    %52 = arith.addf %49, %51 : vector<16x256xf32>
    %c0_30 = arith.constant 0 : index
    %c0_31 = arith.constant 0 : index
    %53 = vector.load %arg6[%c0_30, %c0_31] : memref<16x256xf32, #tpu.memory_space<vmem>>, vector<16x256xf32>
    tpu.vector_store %arg6[%c0_30, %c0_31], %52 {strides = array<i32>} : memref<16x256xf32, #tpu.memory_space<vmem>>, vector<16x256xf32>,
    return
  }
  func.func @transform_0(%arg0: i32) -> (i32, i32) {
    %c0_i32 = arith.constant 0 : i32
    %c0_i32_0 = arith.constant 0 : i32
    return %arg0, %c0_i32 : i32, i32
  }
  func.func @transform_1(%arg0: i32) -> (i32, i32, i32) {
    %c0_i32 = arith.constant 0 : i32
    %c0_i32_0 = arith.constant 0 : i32
    %c0_i32_1 = arith.constant 0 : i32
    %c0_i32_2 = arith.constant 0 : i32
    return %c0_i32, %c0_i32_0, %c0_i32_1 : i32, i32, i32
  }
  func.func @transform_2(%arg0: i32) -> (i32, i32, i32) {
    %c0_i32 = arith.constant 0 : i32
    %c0_i32_0 = arith.constant 0 : i32
    %c0_i32_1 = arith.constant 0 : i32
    %c0_i32_2 = arith.constant 0 : i32
    return %c0_i32, %c0_i32_0, %c0_i32_1 : i32, i32, i32
  }
  func.func @transform_3(%arg0: i32) -> (i32, i32, i32) {
    %c0_i32 = arith.constant 0 : i32
    %c0_i32_0 = arith.constant 0 : i32
    %c0_i32_1 = arith.constant 0 : i32
    %c0_i32_2 = arith.constant 0 : i32
    return %c0_i32, %c0_i32_0, %c0_i32_1 : i32, i32, i32
  }
  func.func @transform_4(%arg0: i32) -> (i32, i32) {
    %c0_i32 = arith.constant 0 : i32
    %c0_i32_0 = arith.constant 0 : i32
    %c0_i32_1 = arith.constant 0 : i32
    return %c0_i32, %c0_i32_0 : i32, i32
  }
  func.func @transform_5(%arg0: i32) -> (i32, i32) {
    %c0_i32 = arith.constant 0 : i32
    %c0_i32_0 = arith.constant 0 : i32
    return %arg0, %c0_i32 : i32, i32
  }
}

</mosaic_0001>

<llo_original>
// kernel: mlp_pallas.1
$region0: #{mlp_pallas.1}
  #allocation0 [shape = 'u32[]', space=smem, size = 0x4, offset = 0x4, fixed_abs, tag = 'smem constant byte address 0x4 - core index']
  #allocation1 [shape = 'u32[144,128]{1,0:T(1,128)}', space=vmem, size = 0x12000, scoped, tag = 'internal scratch']
  %s0 = inlined_call_operand.vmem [shape: f32[48,128], index: 0, kind: input, shape index: {}]
  %s1 = inlined_call_operand.vmem [shape: f32[3,128,128], index: 1, kind: input, shape index: {}]
  %s2 = inlined_call_operand.vmem [shape: f32[3,1,128], index: 2, kind: input, shape index: {}]
  %s3 = inlined_call_operand.vmem [shape: f32[3,128,256], index: 3, kind: input, shape index: {}]
  %s4 = inlined_call_operand.vmem [shape: f32[1,256], index: 4, kind: input, shape index: {}]
  %s5 = inlined_call_operand.hbm [shape: f32[48,256], index: 5, kind: output, shape index: {}]
  %s6 = sld [smem:[#allocation0]]
  $region53: #{mlp_pallas.1} parent=0
    _
  %s8 = ssub.s32 1, %s6
  %s9 = scalar_select 0, %s8, %s6
  $region1: #{mlp_pallas.1} parent=0
    #allocation2 [shape = 'u8[32768]{0}', space=vmem, size = 0x8000, scoped, tag = 'output window, operand 0']
    #allocation3 [shape = 's32[2]{0}', space=sflag, size = 0x8, scoped, tag = 'scoped memory for mlp_pallas.1']
    %10 = vsyncpa [#allocation3], 0
    %s11 = scalar_lea.sflag [#allocation3], 1
    %12 = vsyncpa %s11, 0
    loop: start=0, step=1, limit=5
    $region2: #{mlp_pallas.1} parent=1 // loop_pre_header
      _
    $region3: #{mlp_pallas.1} parent=1 // loop_header
      %s14 = sphi 0, %s18
      %p15 = scmp.ge.s32.totalorder %s14, 5
      %s24 = sphi 0, %s26
      %s27 = sphi 0, %s24
      %s28 = sphi 0, %s27
      %s44 = sphi 0, %s28
      %s48 = sphi 0, %s48
      %s50 = sphi 0, %s48
      %s51 = sphi 0, %s50
      %s65 = sphi 0, %s51
      %s69 = sphi 0, %s69
      %s71 = sphi 0, %s69
      %s72 = sphi 0, %s71
      %s86 = sphi 0, %s72
      %s90 = sphi 0, %s90
      %s92 = sphi 0, %s90
      %s93 = sphi 0, %s92
      %s107 = sphi 0, %s93
      %s111 = sphi 0, %s111
      %s113 = sphi 0, %s111
      %s114 = sphi 0, %s113
      %s128 = sphi 0, %s114
      %s134 = sphi 0, %s136
      %s137 = sphi 0, %s134
      %s138 = sphi 0, %s137
      %s154 = sphi 0, %s138
    $region4: #{mlp_pallas.1} parent=1 // loop_header_branch
      %17 = sbr.rel (%p15) target = $region8
    $region5: #{mlp_pallas.1} parent=1 // loop_body
      %s19 = ssub.s32 %s14, 1
      %s20 = ssub.s32 %s14, 2
      %s21 = sadd.s32 %s14, 1
      %s22 = ssub.s32 %s14, %s21
      %p23 = scmp.eq.s32.totalorder %s22, 0
      %s25 = sadd.s32 %s24, 1
      %s26 = scalar_select %p23, %s24, %s25
      %p29 = pneg %p23
      %p30 = scmp.eq.s32.totalorder %s14, 2
      %p31 = por %p29, %p30
      %p32 = scmp.ne.s32.totalorder %s24, %s27
      %p33 = scmp.eq.s32.totalorder %s14, 0
      %p34 = por %p32, %p33
      %p35 = scmp.ne.s32.totalorder %s24, %s27
      %p36 = scmp.eq.s32.totalorder %s19, 2
      %p37 = por %p35, %p36
      %p38 = scmp.ne.s32.totalorder %s27, %s28
      %p39 = scmp.eq.s32.totalorder %s19, 0
      %p40 = por %p38, %p39
      %p41 = scmp.ne.s32.totalorder %s27, %s28
      %p42 = scmp.eq.s32.totalorder %s20, 2
      %p43 = por %p41, %p42
      %p45 = scmp.ne.s32.totalorder %s28, %s44
      %p46 = scmp.eq.s32.totalorder %s20, 0
      %p47 = por %p45, %p46
      %s49 = sadd.s32 %s48, 1
      %p52 = scmp.eq.s32.totalorder %s14, 2
      %p53 = scmp.ne.s32.totalorder %s48, %s50
      %p54 = scmp.eq.s32.totalorder %s14, 0
      %p55 = por %p53, %p54
      %p56 = scmp.ne.s32.totalorder %s48, %s50
      %p57 = scmp.eq.s32.totalorder %s19, 2
      %p58 = por %p56, %p57
      %p59 = scmp.ne.s32.totalorder %s50, %s51
      %p60 = scmp.eq.s32.totalorder %s19, 0
      %p61 = por %p59, %p60
      %p62 = scmp.ne.s32.totalorder %s50, %s51
      %p63 = scmp.eq.s32.totalorder %s20, 2
      %p64 = por %p62, %p63
      %p66 = scmp.ne.s32.totalorder %s51, %s65
      %p67 = scmp.eq.s32.totalorder %s20, 0
      %p68 = por %p66, %p67
      %s70 = sadd.s32 %s69, 1
      %p73 = scmp.eq.s32.totalorder %s14, 2
      %p74 = scmp.ne.s32.totalorder %s69, %s71
      %p75 = scmp.eq.s32.totalorder %s14, 0
      %p76 = por %p74, %p75
      %p77 = scmp.ne.s32.totalorder %s69, %s71
      %p78 = scmp.eq.s32.totalorder %s19, 2
      %p79 = por %p77, %p78
      %p80 = scmp.ne.s32.totalorder %s71, %s72
      %p81 = scmp.eq.s32.totalorder %s19, 0
      %p82 = por %p80, %p81
      %p83 = scmp.ne.s32.totalorder %s71, %s72
      %p84 = scmp.eq.s32.totalorder %s20, 2
      %p85 = por %p83, %p84
      %p87 = scmp.ne.s32.totalorder %s72, %s86
      %p88 = scmp.eq.s32.totalorder %s20, 0
      %p89 = por %p87, %p88
      %s91 = sadd.s32 %s90, 1
      %p94 = scmp.eq.s32.totalorder %s14, 2
      %p95 = scmp.ne.s32.totalorder %s90, %s92
      %p96 = scmp.eq.s32.totalorder %s14, 0
      %p97 = por %p95, %p96
      %p98 = scmp.ne.s32.totalorder %s90, %s92
      %p99 = scmp.eq.s32.totalorder %s19, 2
      %p100 = por %p98, %p99
      %p101 = scmp.ne.s32.totalorder %s92, %s93
      %p102 = scmp.eq.s32.totalorder %s19, 0
      %p103 = por %p101, %p102
      %p104 = scmp.ne.s32.totalorder %s92, %s93
      %p105 = scmp.eq.s32.totalorder %s20, 2
      %p106 = por %p104, %p105
      %p108 = scmp.ne.s32.totalorder %s93, %s107
      %p109 = scmp.eq.s32.totalorder %s20, 0
      %p110 = por %p108, %p109
      %s112 = sadd.s32 %s111, 1
      %p115 = scmp.eq.s32.totalorder %s14, 2
      %p116 = scmp.ne.s32.totalorder %s111, %s113
      %p117 = scmp.eq.s32.totalorder %s14, 0
      %p118 = por %p116, %p117
      %p119 = scmp.ne.s32.totalorder %s111, %s113
      %p120 = scmp.eq.s32.totalorder %s19, 2
      %p121 = por %p119, %p120
      %p122 = scmp.ne.s32.totalorder %s113, %s114
      %p123 = scmp.eq.s32.totalorder %s19, 0
      %p124 = por %p122, %p123
      %p125 = scmp.ne.s32.totalorder %s113, %s114
      %p126 = scmp.eq.s32.totalorder %s20, 2
      %p127 = por %p125, %p126
      %p129 = scmp.ne.s32.totalorder %s114, %s128
      %p130 = scmp.eq.s32.totalorder %s20, 0
      %p131 = por %p129, %p130
      %s132 = ssub.s32 %s14, %s21
      %p133 = scmp.eq.s32.totalorder %s132, 0
      %s135 = sadd.s32 %s134, 1
      %s136 = scalar_select %p133, %s134, %s135
      %p139 = pneg %p133
      %p140 = scmp.eq.s32.totalorder %s14, 2
      %p141 = por %p139, %p140
      %p142 = scmp.ne.s32.totalorder %s134, %s137
      %p143 = scmp.eq.s32.totalorder %s14, 0
      %p144 = por %p142, %p143
      %p145 = scmp.ne.s32.totalorder %s134, %s137
      %p146 = scmp.eq.s32.totalorder %s19, 2
      %p147 = por %p145, %p146
      %p148 = scmp.ne.s32.totalorder %s137, %s138
      %p149 = scmp.eq.s32.totalorder %s19, 0
      %p150 = por %p148, %p149
      %p151 = scmp.ne.s32.totalorder %s137, %s138
      %p152 = scmp.eq.s32.totalorder %s20, 2
      %p153 = por %p151, %p152
      %p155 = scmp.ne.s32.totalorder %s138, %s154
      %p156 = scmp.eq.s32.totalorder %s20, 0
      %p157 = por %p155, %p156
      %p158 = scmp.le.s32.totalorder 1, %s14
      %p159 = scmp.lt.s32.totalorder %s14, 4
      %p160 = pnand %p158, %p159
      %p161 = pneg %p160
      // Predicated region
      $region9: #{mlp_pallas.1} parent=5 // pred_check
        _
      $region10: #{mlp_pallas.1} parent=5 // pred_check_branch
        %163 = sbr.rel (%p160) target = $region12
      $region11: #{mlp_pallas.1} parent=5 // pred_region
        %s164 = ssub.s32 %s14, 1
        // Predicated region
        $region13: #{mlp_pallas.1} parent=11 // pred_check
          %p165 = pneg %p61
        $region14: #{mlp_pallas.1} parent=11 // pred_check_branch
          %167 = sbr.rel (%p165) target = $region16
        $region15: #{mlp_pallas.1} parent=11 // pred_region
          _
        $region16: #{mlp_pallas.1} parent=11 // pred_fallthru
          _
        // Predicated region
        $region17: #{mlp_pallas.1} parent=11 // pred_check
          %p168 = pneg %p82
        $region18: #{mlp_pallas.1} parent=11 // pred_check_branch
          %170 = sbr.rel (%p168) target = $region20
        $region19: #{mlp_pallas.1} parent=11 // pred_region
          _
        $region20: #{mlp_pallas.1} parent=11 // pred_fallthru
          _
        // Predicated region
        $region21: #{mlp_pallas.1} parent=11 // pred_check
          %p171 = pneg %p103
        $region22: #{mlp_pallas.1} parent=11 // pred_check_branch
          %173 = sbr.rel (%p171) target = $region24
        $region23: #{mlp_pallas.1} parent=11 // pred_region
          _
        $region24: #{mlp_pallas.1} parent=11 // pred_fallthru
          _
        // Predicated region
        $region25: #{mlp_pallas.1} parent=11 // pred_check
          %p174 = pneg %p124
        $region26: #{mlp_pallas.1} parent=11 // pred_check_branch
          %176 = sbr.rel (%p174) target = $region28
        $region27: #{mlp_pallas.1} parent=11 // pred_region
          _
        $region28: #{mlp_pallas.1} parent=11 // pred_fallthru
          _
      $region12: #{mlp_pallas.1} parent=5 // pred_fallthru
        _
      %p177 = scmp.lt.s32.totalorder %s14, 3
      // Predicated region
      $region29: #{mlp_pallas.1} parent=5 // pred_check
        %p178 = pneg %p177
      $region30: #{mlp_pallas.1} parent=5 // pred_check_branch
        %180 = sbr.rel (%p178) target = $region32
      $region31: #{mlp_pallas.1} parent=5 // pred_region
        // Predicated region
        $region33: #{mlp_pallas.1} parent=31 // pred_check
          %p181 = pneg %p34
        $region34: #{mlp_pallas.1} parent=31 // pred_check_branch
          %183 = sbr.rel (%p181) target = $region36
        $region35: #{mlp_pallas.1} parent=31 // pred_region
          %s184 = smul.u32 2, %s14
          %p185 = scmp.lt.s32.totalorder %s184, 5
          %s186 = scalar_select %p185, %s184, 5
          %s187 = smul.addr %s186, 8
          %s188 = scalar_lea.vmem %s0, %s187
          %s189 = smul.u32 2, %s14
        $region36: #{mlp_pallas.1} parent=31 // pred_fallthru
          _
      $region32: #{mlp_pallas.1} parent=5 // pred_fallthru
        _
      %p190 = scmp.le.s32.totalorder 1, %s14
      %p191 = scmp.lt.s32.totalorder %s14, 4
      %p192 = pnand %p190, %p191
      %p193 = pneg %p192
      // Predicated region
      $region37: #{mlp_pallas.1} parent=5 // pred_check
        _
      $region38: #{mlp_pallas.1} parent=5 // pred_check_branch
        %195 = sbr.rel (%p192) target = $region40
      $region39: #{mlp_pallas.1} parent=5 // pred_region
        %s196 = ssub.s32 %s14, 1
        %s197 = smul.u32 2, %s19
        %p198 = scmp.lt.s32.totalorder %s197, 5
        %s199 = scalar_select %p198, %s197, 5
        %s200 = smul.addr %s199, 8
        %s201 = scalar_lea.vmem %s0, %s200
        %p202 = pneg %p40
        %p203 = pneg %p37
        %p204 = pneg %p61
        %p205 = pneg %p58
        %p206 = pneg %p82
        %p207 = pneg %p79
        %p208 = pneg %p103
        %p209 = pneg %p100
        %p210 = pneg %p124
        %p211 = pneg %p121
        %p212 = pneg %p150
        %p213 = pneg %p147
        %s214 = sand.u32 %s137, 1
        %s215 = scalar_lea.sflag [#allocation3], %s214
        %s216 = sand.u32 %s137, 1
        %s217 = smul.addr %s216, 32
        %s218 = scalar_lea.vmem [#allocation2], %s217
        %s219 = smul.u32 2, %s19
        %p220 = scmp.lt.s32.totalorder %s219, 5
        %s221 = scalar_select %p220, %s219, 5
        %s222 = smul.addr %s221, 8
        %s223 = scalar_lea.vmem %s0, %s222
        %s224 = smul.u32 2, %s19
        %s225 = smul.u32 2, %s19
        %v226 = vld [vmem:[%s223] sm:$0xff]
        %v227 = vld [vmem:[%s223 + $0x8] sm:$0xff]
        %v228 = vld [vmem:[%s1] sm:$0xff]
        %v229 = vld [vmem:[%s1 + $0x8] sm:$0xff]
        %v230 = vld [vmem:[%s1 + $0x10] sm:$0xff]
        %v231 = vld [vmem:[%s1 + $0x18] sm:$0xff]
        %v232 = vld [vmem:[%s1 + $0x20] sm:$0xff]
        %v233 = vld [vmem:[%s1 + $0x28] sm:$0xff]
        %v234 = vld [vmem:[%s1 + $0x30] sm:$0xff]
        %v235 = vld [vmem:[%s1 + $0x38] sm:$0xff]
        %v236 = vld [vmem:[%s1 + $0x40] sm:$0xff]
        %v237 = vld [vmem:[%s1 + $0x48] sm:$0xff]
        %v238 = vld [vmem:[%s1 + $0x50] sm:$0xff]
        %v239 = vld [vmem:[%s1 + $0x58] sm:$0xff]
        %v240 = vld [vmem:[%s1 + $0x60] sm:$0xff]
        %v241 = vld [vmem:[%s1 + $0x68] sm:$0xff]
        %v242 = vld [vmem:[%s1 + $0x70] sm:$0xff]
        %v243 = vld [vmem:[%s1 + $0x78] sm:$0xff]
        %v244 = vld [vmem:[%s2] sm:$0x1]
        %v246 = vlaneseq
        %v247 = vshrl.u32 %v246, 7
        %v248 = vsub.s32 0, %v247
        %v249 = vrot.slane %v244, %v248
        %251 = vmatprep.subr.mxu0 0.0
        %252 = vmatpush1.msra.mxu0 %v228
        %253 = vmatprep.subr.mxu0 0.0
        %254 = vmatpush1.msra.mxu0 %v229
        %255 = vmatprep.subr.mxu0 0.0
        %256 = vmatpush1.msra.mxu0 %v230
        %257 = vmatprep.subr.mxu0 0.0
        %258 = vmatpush1.msra.mxu0 %v231
        %259 = vmatprep.subr.mxu0 0.0
        %260 = vmatpush1.msra.mxu0 %v232
        %261 = vmatprep.subr.mxu0 0.0
        %262 = vmatpush1.msra.mxu0 %v233
        %263 = vmatprep.subr.mxu0 0.0
        %264 = vmatpush1.msra.mxu0 %v234
        %265 = vmatprep.subr.mxu0 0.0
        %266 = vmatpush1.msra.mxu0 %v235
        %267 = vmatprep.subr.mxu0 0.0
        %268 = vmatpush1.msra.mxu0 %v236
        %269 = vmatprep.subr.mxu0 0.0
        %270 = vmatpush1.msra.mxu0 %v237
        %271 = vmatprep.subr.mxu0 0.0
        %272 = vmatpush1.msra.mxu0 %v238
        %273 = vmatprep.subr.mxu0 0.0
        %274 = vmatpush1.msra.mxu0 %v239
        %275 = vmatprep.subr.mxu0 0.0
        %276 = vmatpush1.msra.mxu0 %v240
        %277 = vmatprep.subr.mxu0 0.0
        %278 = vmatpush1.msra.mxu0 %v241
        %279 = vmatprep.subr.mxu0 0.0
        %280 = vmatpush1.msra.mxu0 %v242
        %281 = vmatprep.subr.mxu0 0.0
        %282 = vmatpush1.msra.mxu0 %v243
        %283 = vmatprep.subr.mxu0 0.0
        %284 = vmatpush1.msra.mxu0 0.0
        %285 = vmatprep.subr.mxu0 0.0
        %286 = vmatpush1.msra.mxu0 0.0
        %287 = vmatprep.subr.mxu0 0.0
        %288 = vmatpush1.msra.mxu0 0.0
        %289 = vmatprep.subr.mxu0 0.0
        %290 = vmatpush1.msra.mxu0 0.0
        %291 = vmatprep.subr.mxu0 0.0
        %292 = vmatpush1.msra.mxu0 0.0
        %293 = vmatprep.subr.mxu0 0.0
        %294 = vmatpush1.msra.mxu0 0.0
        %295 = vmatprep.subr.mxu0 0.0
        %296 = vmatpush1.msra.mxu0 0.0
        %297 = vmatprep.subr.mxu0 0.0
        %298 = vmatpush1.msra.mxu0 0.0
        %299 = vmatprep.subr.mxu0 0.0
        %300 = vmatpush1.msra.mxu0 0.0
        %301 = vmatprep.subr.mxu0 0.0
        %302 = vmatpush1.msra.mxu0 0.0
        %303 = vmatprep.subr.mxu0 0.0
        %304 = vmatpush1.msra.mxu0 0.0
        %305 = vmatprep.subr.mxu0 0.0
        %306 = vmatpush1.msra.mxu0 0.0
        %307 = vmatprep.subr.mxu0 0.0
        %308 = vmatpush1.msra.mxu0 0.0
        %309 = vmatprep.subr.mxu0 0.0
        %310 = vmatpush1.msra.mxu0 0.0
        %311 = vmatprep.subr.mxu0 0.0
        %312 = vmatpush1.msra.mxu0 0.0
        %313 = vmatprep.subr.mxu0 0.0
        %314 = vmatpush1.msra.mxu0 0.0
        %315 = vmatprep.mubr.f32.mxu0 0.0
        %316 = vmatmul.mubr.f32.gmra.mrb[0].mxu0 %v226
        %v317 = vpop.f32.mrb[0].mxu0
        %v318 = vadd.f32 %v249, %v317
        %v319 = vpop.f32.mrb[0].mxu0
        %320 = vmatprep.mubr.f32.mxu0 0.0
        %321 = vmatmul.mubr.f32.gmra.mrb[0].mxu0 %v227
        %v322 = vpop.f32.mrb[0].mxu0
        %v323 = vadd.f32 %v249, %v322
        %v324 = vpop.f32.mrb[0].mxu0
        %325 = vdwg.mxu0
        %v326 = vmax.f32 %v318, 0.0
        %v327 = vmax.f32 %v323, 0.0
        %v328 = vld [vmem:[%s3] sm:$0xff]
        %v329 = vld [vmem:[%s3 + $0x8] sm:$0xff]
        %v330 = vld [vmem:[%s3 + $0x10] sm:$0xff]
        %v331 = vld [vmem:[%s3 + $0x18] sm:$0xff]
        %v332 = vld [vmem:[%s3 + $0x20] sm:$0xff]
        %v333 = vld [vmem:[%s3 + $0x28] sm:$0xff]
        %v334 = vld [vmem:[%s3 + $0x30] sm:$0xff]
        %v335 = vld [vmem:[%s3 + $0x38] sm:$0xff]
        %v336 = vld [vmem:[%s3 + $0x40] sm:$0xff]
        %v337 = vld [vmem:[%s3 + $0x48] sm:$0xff]
        %v338 = vld [vmem:[%s3 + $0x50] sm:$0xff]
        %v339 = vld [vmem:[%s3 + $0x58] sm:$0xff]
        %v340 = vld [vmem:[%s3 + $0x60] sm:$0xff]
        %v341 = vld [vmem:[%s3 + $0x68] sm:$0xff]
        %v342 = vld [vmem:[%s3 + $0x70] sm:$0xff]
        %v343 = vld [vmem:[%s3 + $0x78] sm:$0xff]
        %v344 = vld [vmem:[%s3 + $0x80] sm:$0xff]
        %v345 = vld [vmem:[%s3 + $0x88] sm:$0xff]
        %v346 = vld [vmem:[%s3 + $0x90] sm:$0xff]
        %v347 = vld [vmem:[%s3 + $0x98] sm:$0xff]
        %v348 = vld [vmem:[%s3 + $0xa0] sm:$0xff]
        %v349 = vld [vmem:[%s3 + $0xa8] sm:$0xff]
        %v350 = vld [vmem:[%s3 + $0xb0] sm:$0xff]
        %v351 = vld [vmem:[%s3 + $0xb8] sm:$0xff]
        %v352 = vld [vmem:[%s3 + $0xc0] sm:$0xff]
        %v353 = vld [vmem:[%s3 + $0xc8] sm:$0xff]
        %v354 = vld [vmem:[%s3 + $0xd0] sm:$0xff]
        %v355 = vld [vmem:[%s3 + $0xd8] sm:$0xff]
        %v356 = vld [vmem:[%s3 + $0xe0] sm:$0xff]
        %v357 = vld [vmem:[%s3 + $0xe8] sm:$0xff]
        %v358 = vld [vmem:[%s3 + $0xf0] sm:$0xff]
        %v359 = vld [vmem:[%s3 + $0xf8] sm:$0xff]
        %s360 = scalar_lea.vmem %s1, 128
        %v361 = vld [vmem:[%s360] sm:$0xff]
        %v362 = vld [vmem:[%s360 + $0x8] sm:$0xff]
        %v363 = vld [vmem:[%s360 + $0x10] sm:$0xff]
        %v364 = vld [vmem:[%s360 + $0x18] sm:$0xff]
        %v365 = vld [vmem:[%s360 + $0x20] sm:$0xff]
        %v366 = vld [vmem:[%s360 + $0x28] sm:$0xff]
        %v367 = vld [vmem:[%s360 + $0x30] sm:$0xff]
        %v368 = vld [vmem:[%s360 + $0x38] sm:$0xff]
        %v369 = vld [vmem:[%s360 + $0x40] sm:$0xff]
        %v370 = vld [vmem:[%s360 + $0x48] sm:$0xff]
        %v371 = vld [vmem:[%s360 + $0x50] sm:$0xff]
        %v372 = vld [vmem:[%s360 + $0x58] sm:$0xff]
        %v373 = vld [vmem:[%s360 + $0x60] sm:$0xff]
        %v374 = vld [vmem:[%s360 + $0x68] sm:$0xff]
        %v375 = vld [vmem:[%s360 + $0x70] sm:$0xff]
        %v376 = vld [vmem:[%s360 + $0x78] sm:$0xff]
        %s377 = scalar_lea.vmem %s2, 1
        %v378 = vld [vmem:[%s377] sm:$0x1]
        %v380 = vlaneseq
        %v381 = vshrl.u32 %v380, 7
        %v382 = vsub.s32 0, %v381
        %v383 = vrot.slane %v378, %v382
        %385 = vmatprep.subr.mxu0 0.0
        %386 = vmatpush1.msra.mxu0 %v361
        %387 = vmatprep.subr.mxu0 0.0
        %388 = vmatpush1.msra.mxu0 %v362
        %389 = vmatprep.subr.mxu0 0.0
        %390 = vmatpush1.msra.mxu0 %v363
        %391 = vmatprep.subr.mxu0 0.0
        %392 = vmatpush1.msra.mxu0 %v364
        %393 = vmatprep.subr.mxu0 0.0
        %394 = vmatpush1.msra.mxu0 %v365
        %395 = vmatprep.subr.mxu0 0.0
        %396 = vmatpush1.msra.mxu0 %v366
        %397 = vmatprep.subr.mxu0 0.0
        %398 = vmatpush1.msra.mxu0 %v367
        %399 = vmatprep.subr.mxu0 0.0
        %400 = vmatpush1.msra.mxu0 %v368
        %401 = vmatprep.subr.mxu0 0.0
        %402 = vmatpush1.msra.mxu0 %v369
        %403 = vmatprep.subr.mxu0 0.0
        %404 = vmatpush1.msra.mxu0 %v370
        %405 = vmatprep.subr.mxu0 0.0
        %406 = vmatpush1.msra.mxu0 %v371
        %407 = vmatprep.subr.mxu0 0.0
        %408 = vmatpush1.msra.mxu0 %v372
        %409 = vmatprep.subr.mxu0 0.0
        %410 = vmatpush1.msra.mxu0 %v373
        %411 = vmatprep.subr.mxu0 0.0
        %412 = vmatpush1.msra.mxu0 %v374
        %413 = vmatprep.subr.mxu0 0.0
        %414 = vmatpush1.msra.mxu0 %v375
        %415 = vmatprep.subr.mxu0 0.0
        %416 = vmatpush1.msra.mxu0 %v376
        %417 = vmatprep.subr.mxu0 0.0
        %418 = vmatpush1.msra.mxu0 0.0
        %419 = vmatprep.subr.mxu0 0.0
        %420 = vmatpush1.msra.mxu0 0.0
        %421 = vmatprep.subr.mxu0 0.0
        %422 = vmatpush1.msra.mxu0 0.0
        %423 = vmatprep.subr.mxu0 0.0
        %424 = vmatpush1.msra.mxu0 0.0
        %425 = vmatprep.subr.mxu0 0.0
        %426 = vmatpush1.msra.mxu0 0.0
        %427 = vmatprep.subr.mxu0 0.0
        %428 = vmatpush1.msra.mxu0 0.0
        %429 = vmatprep.subr.mxu0 0.0
        %430 = vmatpush1.msra.mxu0 0.0
        %431 = vmatprep.subr.mxu0 0.0
        %432 = vmatpush1.msra.mxu0 0.0
        %433 = vmatprep.subr.mxu0 0.0
        %434 = vmatpush1.msra.mxu0 0.0
        %435 = vmatprep.subr.mxu0 0.0
        %436 = vmatpush1.msra.mxu0 0.0
        %437 = vmatprep.subr.mxu0 0.0
        %438 = vmatpush1.msra.mxu0 0.0
        %439 = vmatprep.subr.mxu0 0.0
        %440 = vmatpush1.msra.mxu0 0.0
        %441 = vmatprep.subr.mxu0 0.0
        %442 = vmatpush1.msra.mxu0 0.0
        %443 = vmatprep.subr.mxu0 0.0
        %444 = vmatpush1.msra.mxu0 0.0
        %445 = vmatprep.subr.mxu0 0.0
        %446 = vmatpush1.msra.mxu0 0.0
        %447 = vmatprep.subr.mxu0 0.0
        %448 = vmatpush1.msra.mxu0 0.0
        %449 = vmatprep.mubr.f32.mxu0 0.0
        %450 = vmatmul.mubr.f32.gmra.mrb[0].mxu0 %v226
        %v451 = vpop.f32.mrb[0].mxu0
        %v452 = vadd.f32 %v383, %v451
        %v453 = vpop.f32.mrb[0].mxu0
        %454 = vmatprep.mubr.f32.mxu0 0.0
        %455 = vmatmul.mubr.f32.gmra.mrb[0].mxu0 %v227
        %v456 = vpop.f32.mrb[0].mxu0
        %v457 = vadd.f32 %v383, %v456
        %v458 = vpop.f32.mrb[0].mxu0
        %459 = vdwg.mxu0
        %v460 = vmax.f32 %v452, 0.0
        %v461 = vmax.f32 %v457, 0.0
        %s462 = scalar_lea.vmem %s3, 256
        %v463 = vld [vmem:[%s462] sm:$0xff]
        %v464 = vld [vmem:[%s462 + $0x8] sm:$0xff]
        %v465 = vld [vmem:[%s462 + $0x10] sm:$0xff]
        %v466 = vld [vmem:[%s462 + $0x18] sm:$0xff]
        %v467 = vld [vmem:[%s462 + $0x20] sm:$0xff]
        %v468 = vld [vmem:[%s462 + $0x28] sm:$0xff]
        %v469 = vld [vmem:[%s462 + $0x30] sm:$0xff]
        %v470 = vld [vmem:[%s462 + $0x38] sm:$0xff]
        %v471 = vld [vmem:[%s462 + $0x40] sm:$0xff]
        %v472 = vld [vmem:[%s462 + $0x48] sm:$0xff]
        %v473 = vld [vmem:[%s462 + $0x50] sm:$0xff]
        %v474 = vld [vmem:[%s462 + $0x58] sm:$0xff]
        %v475 = vld [vmem:[%s462 + $0x60] sm:$0xff]
        %v476 = vld [vmem:[%s462 + $0x68] sm:$0xff]
        %v477 = vld [vmem:[%s462 + $0x70] sm:$0xff]
        %v478 = vld [vmem:[%s462 + $0x78] sm:$0xff]
        %v479 = vld [vmem:[%s462 + $0x80] sm:$0xff]
        %v480 = vld [vmem:[%s462 + $0x88] sm:$0xff]
        %v481 = vld [vmem:[%s462 + $0x90] sm:$0xff]
        %v482 = vld [vmem:[%s462 + $0x98] sm:$0xff]
        %v483 = vld [vmem:[%s462 + $0xa0] sm:$0xff]
        %v484 = vld [vmem:[%s462 + $0xa8] sm:$0xff]
        %v485 = vld [vmem:[%s462 + $0xb0] sm:$0xff]
        %v486 = vld [vmem:[%s462 + $0xb8] sm:$0xff]
        %v487 = vld [vmem:[%s462 + $0xc0] sm:$0xff]
        %v488 = vld [vmem:[%s462 + $0xc8] sm:$0xff]
        %v489 = vld [vmem:[%s462 + $0xd0] sm:$0xff]
        %v490 = vld [vmem:[%s462 + $0xd8] sm:$0xff]
        %v491 = vld [vmem:[%s462 + $0xe0] sm:$0xff]
        %v492 = vld [vmem:[%s462 + $0xe8] sm:$0xff]
        %v493 = vld [vmem:[%s462 + $0xf0] sm:$0xff]
        %v494 = vld [vmem:[%s462 + $0xf8] sm:$0xff]
        %495 = vmatprep.subr.mxu0 %v464
        %496 = vmatpush1.msra.mxu0 %v463
        %497 = vmatprep.subr.mxu0 %v466
        %498 = vmatpush1.msra.mxu0 %v465
        %499 = vmatprep.subr.mxu0 %v468
        %500 = vmatpush1.msra.mxu0 %v467
        %501 = vmatprep.subr.mxu0 %v470
        %502 = vmatpush1.msra.mxu0 %v469
        %503 = vmatprep.subr.mxu0 %v472
        %504 = vmatpush1.msra.mxu0 %v471
        %505 = vmatprep.subr.mxu0 %v474
        %506 = vmatpush1.msra.mxu0 %v473
        %507 = vmatprep.subr.mxu0 %v476
        %508 = vmatpush1.msra.mxu0 %v475
        %509 = vmatprep.subr.mxu0 %v478
        %510 = vmatpush1.msra.mxu0 %v477
        %511 = vmatprep.subr.mxu0 %v480
        %512 = vmatpush1.msra.mxu0 %v479
        %513 = vmatprep.subr.mxu0 %v482
        %514 = vmatpush1.msra.mxu0 %v481
        %515 = vmatprep.subr.mxu0 %v484
        %516 = vmatpush1.msra.mxu0 %v483
        %517 = vmatprep.subr.mxu0 %v486
        %518 = vmatpush1.msra.mxu0 %v485
        %519 = vmatprep.subr.mxu0 %v488
        %520 = vmatpush1.msra.mxu0 %v487
        %521 = vmatprep.subr.mxu0 %v490
        %522 = vmatpush1.msra.mxu0 %v489
        %523 = vmatprep.subr.mxu0 %v492
        %524 = vmatpush1.msra.mxu0 %v491
        %525 = vmatprep.subr.mxu0 %v494
        %526 = vmatpush1.msra.mxu0 %v493
        %527 = vmatprep.subr.mxu0 0.0
        %528 = vmatpush1.msra.mxu0 0.0
        %529 = vmatprep.subr.mxu0 0.0
        %530 = vmatpush1.msra.mxu0 0.0
        %531 = vmatprep.subr.mxu0 0.0
        %532 = vmatpush1.msra.mxu0 0.0
        %533 = vmatprep.subr.mxu0 0.0
        %534 = vmatpush1.msra.mxu0 0.0
        %535 = vmatprep.subr.mxu0 0.0
        %536 = vmatpush1.msra.mxu0 0.0
        %537 = vmatprep.subr.mxu0 0.0
        %538 = vmatpush1.msra.mxu0 0.0
        %539 = vmatprep.subr.mxu0 0.0
        %540 = vmatpush1.msra.mxu0 0.0
        %541 = vmatprep.subr.mxu0 0.0
        %542 = vmatpush1.msra.mxu0 0.0
        %543 = vmatprep.subr.mxu0 0.0
        %544 = vmatpush1.msra.mxu0 0.0
        %545 = vmatprep.subr.mxu0 0.0
        %546 = vmatpush1.msra.mxu0 0.0
        %547 = vmatprep.subr.mxu0 0.0
        %548 = vmatpush1.msra.mxu0 0.0
        %549 = vmatprep.subr.mxu0 0.0
        %550 = vmatpush1.msra.mxu0 0.0
        %551 = vmatprep.subr.mxu0 0.0
        %552 = vmatpush1.msra.mxu0 0.0
        %553 = vmatprep.subr.mxu0 0.0
        %554 = vmatpush1.msra.mxu0 0.0
        %555 = vmatprep.subr.mxu0 0.0
        %556 = vmatpush1.msra.mxu0 0.0
        %557 = vmatprep.subr.mxu0 0.0
        %558 = vmatpush1.msra.mxu0 0.0
        %559 = vmatprep.mubr.f32.mxu0 0.0
        %560 = vmatmul.mubr.f32.gmra.mrb[0].mxu0 %v460
        %v561 = vpop.f32.mrb[0].mxu0
        %v562 = vadd.f32 0.0, %v561
        %v563 = vpop.f32.mrb[0].mxu0
        %v564 = vadd.f32 0.0, %v563
        %565 = vmatprep.mubr.f32.mxu0 0.0
        %566 = vmatmul.mubr.f32.gmra.mrb[0].mxu0 %v461
        %v567 = vpop.f32.mrb[0].mxu0
        %v568 = vadd.f32 0.0, %v567
        %v569 = vpop.f32.mrb[0].mxu0
        %v570 = vadd.f32 0.0, %v569
        %571 = vdwg.mxu0
        %572 = vmatprep.subr.mxu0 %v329
        %573 = vmatpush1.msra.mxu0 %v328
        %574 = vmatprep.subr.mxu0 %v331
        %575 = vmatpush1.msra.mxu0 %v330
        %576 = vmatprep.subr.mxu0 %v333
        %577 = vmatpush1.msra.mxu0 %v332
        %578 = vmatprep.subr.mxu0 %v335
        %579 = vmatpush1.msra.mxu0 %v334
        %580 = vmatprep.subr.mxu0 %v337
        %581 = vmatpush1.msra.mxu0 %v336
        %582 = vmatprep.subr.mxu0 %v339
        %583 = vmatpush1.msra.mxu0 %v338
        %584 = vmatprep.subr.mxu0 %v341
        %585 = vmatpush1.msra.mxu0 %v340
        %586 = vmatprep.subr.mxu0 %v343
        %587 = vmatpush1.msra.mxu0 %v342
        %588 = vmatprep.subr.mxu0 %v345
        %589 = vmatpush1.msra.mxu0 %v344
        %590 = vmatprep.subr.mxu0 %v347
        %591 = vmatpush1.msra.mxu0 %v346
        %592 = vmatprep.subr.mxu0 %v349
        %593 = vmatpush1.msra.mxu0 %v348
        %594 = vmatprep.subr.mxu0 %v351
        %595 = vmatpush1.msra.mxu0 %v350
        %596 = vmatprep.subr.mxu0 %v353
        %597 = vmatpush1.msra.mxu0 %v352
        %598 = vmatprep.subr.mxu0 %v355
        %599 = vmatpush1.msra.mxu0 %v354
        %600 = vmatprep.subr.mxu0 %v357
        %601 = vmatpush1.msra.mxu0 %v356
        %602 = vmatprep.subr.mxu0 %v359
        %603 = vmatpush1.msra.mxu0 %v358
        %604 = vmatprep.subr.mxu0 0.0
        %605 = vmatpush1.msra.mxu0 0.0
        %606 = vmatprep.subr.mxu0 0.0
        %607 = vmatpush1.msra.mxu0 0.0
        %608 = vmatprep.subr.mxu0 0.0
        %609 = vmatpush1.msra.mxu0 0.0
        %610 = vmatprep.subr.mxu0 0.0
        %611 = vmatpush1.msra.mxu0 0.0
        %612 = vmatprep.subr.mxu0 0.0
        %613 = vmatpush1.msra.mxu0 0.0
        %614 = vmatprep.subr.mxu0 0.0
        %615 = vmatpush1.msra.mxu0 0.0
        %616 = vmatprep.subr.mxu0 0.0
        %617 = vmatpush1.msra.mxu0 0.0
        %618 = vmatprep.subr.mxu0 0.0
        %619 = vmatpush1.msra.mxu0 0.0
        %620 = vmatprep.subr.mxu0 0.0
        %621 = vmatpush1.msra.mxu0 0.0
        %622 = vmatprep.subr.mxu0 0.0
        %623 = vmatpush1.msra.mxu0 0.0
        %624 = vmatprep.subr.mxu0 0.0
        %625 = vmatpush1.msra.mxu0 0.0
        %626 = vmatprep.subr.mxu0 0.0
        %627 = vmatpush1.msra.mxu0 0.0
        %628 = vmatprep.subr.mxu0 0.0
        %629 = vmatpush1.msra.mxu0 0.0
        %630 = vmatprep.subr.mxu0 0.0
        %631 = vmatpush1.msra.mxu0 0.0
        %632 = vmatprep.subr.mxu0 0.0
        %633 = vmatpush1.msra.mxu0 0.0
        %634 = vmatprep.subr.mxu0 0.0
        %635 = vmatpush1.msra.mxu0 0.0
        %636 = vmatprep.mubr.f32.mxu0 0.0
        %637 = vmatmul.mubr.f32.gmra.mrb[0].mxu0 %v326
        %v638 = vpop.f32.mrb[0].mxu0
        %v639 = vadd.f32 %v562, %v638
        %v640 = vpop.f32.mrb[0].mxu0
        %v641 = vadd.f32 %v564, %v640
        %642 = vmatprep.mubr.f32.mxu0 0.0
        %643 = vmatmul.mubr.f32.gmra.mrb[0].mxu0 %v327
        %v644 = vpop.f32.mrb[0].mxu0
        %v645 = vadd.f32 %v568, %v644
        %v646 = vpop.f32.mrb[0].mxu0
        %v647 = vadd.f32 %v570, %v646
        %648 = vdwg.mxu0
        %s649 = scalar_lea.vmem %s1, 256
        %v650 = vld [vmem:[%s649] sm:$0xff]
        %v651 = vld [vmem:[%s649 + $0x8] sm:$0xff]
        %v652 = vld [vmem:[%s649 + $0x10] sm:$0xff]
        %v653 = vld [vmem:[%s649 + $0x18] sm:$0xff]
        %v654 = vld [vmem:[%s649 + $0x20] sm:$0xff]
        %v655 = vld [vmem:[%s649 + $0x28] sm:$0xff]
        %v656 = vld [vmem:[%s649 + $0x30] sm:$0xff]
        %v657 = vld [vmem:[%s649 + $0x38] sm:$0xff]
        %v658 = vld [vmem:[%s649 + $0x40] sm:$0xff]
        %v659 = vld [vmem:[%s649 + $0x48] sm:$0xff]
        %v660 = vld [vmem:[%s649 + $0x50] sm:$0xff]
        %v661 = vld [vmem:[%s649 + $0x58] sm:$0xff]
        %v662 = vld [vmem:[%s649 + $0x60] sm:$0xff]
        %v663 = vld [vmem:[%s649 + $0x68] sm:$0xff]
        %v664 = vld [vmem:[%s649 + $0x70] sm:$0xff]
        %v665 = vld [vmem:[%s649 + $0x78] sm:$0xff]
        %s666 = scalar_lea.vmem %s2, 2
        %v667 = vld [vmem:[%s666] sm:$0x1]
        %v669 = vlaneseq
        %v670 = vshrl.u32 %v669, 7
        %v671 = vsub.s32 0, %v670
        %v672 = vrot.slane %v667, %v671
        %674 = vmatprep.subr.mxu0 0.0
        %675 = vmatpush1.msra.mxu0 %v650
        %676 = vmatprep.subr.mxu0 0.0
        %677 = vmatpush1.msra.mxu0 %v651
        %678 = vmatprep.subr.mxu0 0.0
        %679 = vmatpush1.msra.mxu0 %v652
        %680 = vmatprep.subr.mxu0 0.0
        %681 = vmatpush1.msra.mxu0 %v653
        %682 = vmatprep.subr.mxu0 0.0
        %683 = vmatpush1.msra.mxu0 %v654
        %684 = vmatprep.subr.mxu0 0.0
        %685 = vmatpush1.msra.mxu0 %v655
        %686 = vmatprep.subr.mxu0 0.0
        %687 = vmatpush1.msra.mxu0 %v656
        %688 = vmatprep.subr.mxu0 0.0
        %689 = vmatpush1.msra.mxu0 %v657
        %690 = vmatprep.subr.mxu0 0.0
        %691 = vmatpush1.msra.mxu0 %v658
        %692 = vmatprep.subr.mxu0 0.0
        %693 = vmatpush1.msra.mxu0 %v659
        %694 = vmatprep.subr.mxu0 0.0
        %695 = vmatpush1.msra.mxu0 %v660
        %696 = vmatprep.subr.mxu0 0.0
        %697 = vmatpush1.msra.mxu0 %v661
        %698 = vmatprep.subr.mxu0 0.0
        %699 = vmatpush1.msra.mxu0 %v662
        %700 = vmatprep.subr.mxu0 0.0
        %701 = vmatpush1.msra.mxu0 %v663
        %702 = vmatprep.subr.mxu0 0.0
        %703 = vmatpush1.msra.mxu0 %v664
        %704 = vmatprep.subr.mxu0 0.0
        %705 = vmatpush1.msra.mxu0 %v665
        %706 = vmatprep.subr.mxu0 0.0
        %707 = vmatpush1.msra.mxu0 0.0
        %708 = vmatprep.subr.mxu0 0.0
        %709 = vmatpush1.msra.mxu0 0.0
        %710 = vmatprep.subr.mxu0 0.0
        %711 = vmatpush1.msra.mxu0 0.0
        %712 = vmatprep.subr.mxu0 0.0
        %713 = vmatpush1.msra.mxu0 0.0
        %714 = vmatprep.subr.mxu0 0.0
        %715 = vmatpush1.msra.mxu0 0.0
        %716 = vmatprep.subr.mxu0 0.0
        %717 = vmatpush1.msra.mxu0 0.0
        %718 = vmatprep.subr.mxu0 0.0
        %719 = vmatpush1.msra.mxu0 0.0
        %720 = vmatprep.subr.mxu0 0.0
        %721 = vmatpush1.msra.mxu0 0.0
        %722 = vmatprep.subr.mxu0 0.0
        %723 = vmatpush1.msra.mxu0 0.0
        %724 = vmatprep.subr.mxu0 0.0
        %725 = vmatpush1.msra.mxu0 0.0
        %726 = vmatprep.subr.mxu0 0.0
        %727 = vmatpush1.msra.mxu0 0.0
        %728 = vmatprep.subr.mxu0 0.0
        %729 = vmatpush1.msra.mxu0 0.0
        %730 = vmatprep.subr.mxu0 0.0
        %731 = vmatpush1.msra.mxu0 0.0
        %732 = vmatprep.subr.mxu0 0.0
        %733 = vmatpush1.msra.mxu0 0.0
        %734 = vmatprep.subr.mxu0 0.0
        %735 = vmatpush1.msra.mxu0 0.0
        %736 = vmatprep.subr.mxu0 0.0
        %737 = vmatpush1.msra.mxu0 0.0
        %738 = vmatprep.mubr.f32.mxu0 0.0
        %739 = vmatmul.mubr.f32.gmra.mrb[0].mxu0 %v226
        %v740 = vpop.f32.mrb[0].mxu0
        %v741 = vadd.f32 %v672, %v740
        %v742 = vpop.f32.mrb[0].mxu0
        %743 = vmatprep.mubr.f32.mxu0 0.0
        %744 = vmatmul.mubr.f32.gmra.mrb[0].mxu0 %v227
        %v745 = vpop.f32.mrb[0].mxu0
        %v746 = vadd.f32 %v672, %v745
        %v747 = vpop.f32.mrb[0].mxu0
        %748 = vdwg.mxu0
        %v749 = vmax.f32 %v741, 0.0
        %v750 = vmax.f32 %v746, 0.0
        %s751 = scalar_lea.vmem %s3, 512
        %v752 = vld [vmem:[%s751] sm:$0xff]
        %v753 = vld [vmem:[%s751 + $0x8] sm:$0xff]
        %v754 = vld [vmem:[%s751 + $0x10] sm:$0xff]
        %v755 = vld [vmem:[%s751 + $0x18] sm:$0xff]
        %v756 = vld [vmem:[%s751 + $0x20] sm:$0xff]
        %v757 = vld [vmem:[%s751 + $0x28] sm:$0xff]
        %v758 = vld [vmem:[%s751 + $0x30] sm:$0xff]
        %v759 = vld [vmem:[%s751 + $0x38] sm:$0xff]
        %v760 = vld [vmem:[%s751 + $0x40] sm:$0xff]
        %v761 = vld [vmem:[%s751 + $0x48] sm:$0xff]
        %v762 = vld [vmem:[%s751 + $0x50] sm:$0xff]
        %v763 = vld [vmem:[%s751 + $0x58] sm:$0xff]
        %v764 = vld [vmem:[%s751 + $0x60] sm:$0xff]
        %v765 = vld [vmem:[%s751 + $0x68] sm:$0xff]
        %v766 = vld [vmem:[%s751 + $0x70] sm:$0xff]
        %v767 = vld [vmem:[%s751 + $0x78] sm:$0xff]
        %v768 = vld [vmem:[%s751 + $0x80] sm:$0xff]
        %v769 = vld [vmem:[%s751 + $0x88] sm:$0xff]
        %v770 = vld [vmem:[%s751 + $0x90] sm:$0xff]
        %v771 = vld [vmem:[%s751 + $0x98] sm:$0xff]
        %v772 = vld [vmem:[%s751 + $0xa0] sm:$0xff]
        %v773 = vld [vmem:[%s751 + $0xa8] sm:$0xff]
        %v774 = vld [vmem:[%s751 + $0xb0] sm:$0xff]
        %v775 = vld [vmem:[%s751 + $0xb8] sm:$0xff]
        %v776 = vld [vmem:[%s751 + $0xc0] sm:$0xff]
        %v777 = vld [vmem:[%s751 + $0xc8] sm:$0xff]
        %v778 = vld [vmem:[%s751 + $0xd0] sm:$0xff]
        %v779 = vld [vmem:[%s751 + $0xd8] sm:$0xff]
        %v780 = vld [vmem:[%s751 + $0xe0] sm:$0xff]
        %v781 = vld [vmem:[%s751 + $0xe8] sm:$0xff]
        %v782 = vld [vmem:[%s751 + $0xf0] sm:$0xff]
        %v783 = vld [vmem:[%s751 + $0xf8] sm:$0xff]
        %784 = vmatprep.subr.mxu0 %v753
        %785 = vmatpush1.msra.mxu0 %v752
        %786 = vmatprep.subr.mxu0 %v755
        %787 = vmatpush1.msra.mxu0 %v754
        %788 = vmatprep.subr.mxu0 %v757
        %789 = vmatpush1.msra.mxu0 %v756
        %790 = vmatprep.subr.mxu0 %v759
        %791 = vmatpush1.msra.mxu0 %v758
        %792 = vmatprep.subr.mxu0 %v761
        %793 = vmatpush1.msra.mxu0 %v760
        %794 = vmatprep.subr.mxu0 %v763
        %795 = vmatpush1.msra.mxu0 %v762
        %796 = vmatprep.subr.mxu0 %v765
        %797 = vmatpush1.msra.mxu0 %v764
        %798 = vmatprep.subr.mxu0 %v767
        %799 = vmatpush1.msra.mxu0 %v766
        %800 = vmatprep.subr.mxu0 %v769
        %801 = vmatpush1.msra.mxu0 %v768
        %802 = vmatprep.subr.mxu0 %v771
        %803 = vmatpush1.msra.mxu0 %v770
        %804 = vmatprep.subr.mxu0 %v773
        %805 = vmatpush1.msra.mxu0 %v772
        %806 = vmatprep.subr.mxu0 %v775
        %807 = vmatpush1.msra.mxu0 %v774
        %808 = vmatprep.subr.mxu0 %v777
        %809 = vmatpush1.msra.mxu0 %v776
        %810 = vmatprep.subr.mxu0 %v779
        %811 = vmatpush1.msra.mxu0 %v778
        %812 = vmatprep.subr.mxu0 %v781
        %813 = vmatpush1.msra.mxu0 %v780
        %814 = vmatprep.subr.mxu0 %v783
        %815 = vmatpush1.msra.mxu0 %v782
        %816 = vmatprep.subr.mxu0 0.0
        %817 = vmatpush1.msra.mxu0 0.0
        %818 = vmatprep.subr.mxu0 0.0
        %819 = vmatpush1.msra.mxu0 0.0
        %820 = vmatprep.subr.mxu0 0.0
        %821 = vmatpush1.msra.mxu0 0.0
        %822 = vmatprep.subr.mxu0 0.0
        %823 = vmatpush1.msra.mxu0 0.0
        %824 = vmatprep.subr.mxu0 0.0
        %825 = vmatpush1.msra.mxu0 0.0
        %826 = vmatprep.subr.mxu0 0.0
        %827 = vmatpush1.msra.mxu0 0.0
        %828 = vmatprep.subr.mxu0 0.0
        %829 = vmatpush1.msra.mxu0 0.0
        %830 = vmatprep.subr.mxu0 0.0
        %831 = vmatpush1.msra.mxu0 0.0
        %832 = vmatprep.subr.mxu0 0.0
        %833 = vmatpush1.msra.mxu0 0.0
        %834 = vmatprep.subr.mxu0 0.0
        %835 = vmatpush1.msra.mxu0 0.0
        %836 = vmatprep.subr.mxu0 0.0
        %837 = vmatpush1.msra.mxu0 0.0
        %838 = vmatprep.subr.mxu0 0.0
        %839 = vmatpush1.msra.mxu0 0.0
        %840 = vmatprep.subr.mxu0 0.0
        %841 = vmatpush1.msra.mxu0 0.0
        %842 = vmatprep.subr.mxu0 0.0
        %843 = vmatpush1.msra.mxu0 0.0
        %844 = vmatprep.subr.mxu0 0.0
        %845 = vmatpush1.msra.mxu0 0.0
        %846 = vmatprep.subr.mxu0 0.0
        %847 = vmatpush1.msra.mxu0 0.0
        %848 = vmatprep.mubr.f32.mxu0 0.0
        %849 = vmatmul.mubr.f32.gmra.mrb[0].mxu0 %v749
        %v850 = vpop.f32.mrb[0].mxu0
        %v851 = vadd.f32 0.0, %v850
        %v852 = vpop.f32.mrb[0].mxu0
        %v853 = vadd.f32 0.0, %v852
        %854 = vmatprep.mubr.f32.mxu0 0.0
        %855 = vmatmul.mubr.f32.gmra.mrb[0].mxu0 %v750
        %v856 = vpop.f32.mrb[0].mxu0
        %v857 = vadd.f32 0.0, %v856
        %v858 = vpop.f32.mrb[0].mxu0
        %v859 = vadd.f32 0.0, %v858
        %860 = vdwg.mxu0
        %v861 = vadd.f32 %v639, %v851
        %v862 = vadd.f32 %v641, %v853
        %v863 = vadd.f32 %v645, %v857
        %v864 = vadd.f32 %v647, %v859
        %v865 = vld [vmem:[%s4] sm:$0x3]
        %v867 = vlaneseq
        %v868 = vshrl.u32 %v867, 7
        %v869 = vsub.s32 0, %v868
        %v870 = vrot.slane %v865, %v869
        %v871 = vlaneseq
        %v872 = vshrl.u32 %v871, 7
        %v873 = vsub.s32 1, %v872
        %v874 = vrot.slane %v865, %v873
        %v877 = vadd.f32 %v861, %v870
        %v878 = vadd.f32 %v862, %v874
        %v879 = vadd.f32 %v863, %v870
        %v880 = vadd.f32 %v864, %v874
        %881 = vst [vmem:[%s218] sm:$0xff] %v877
        %882 = vst [vmem:[%s218 + $0x8] sm:$0xff] %v878
        %883 = vst [vmem:[%s218 + $0x10] sm:$0xff] %v879
        %884 = vst [vmem:[%s218 + $0x18] sm:$0xff] %v880
        %s885 = sand.u32 %s137, 1
        %s886 = scalar_lea.sflag [#allocation3], %s885
        %s887 = sand.u32 %s137, 1
        %s888 = smul.addr %s887, 32
        %s889 = scalar_lea.vmem [#allocation2], %s888
        // Predicated region
        $region41: #{mlp_pallas.1} parent=39 // pred_check
          %p890 = pneg %p147
        $region42: #{mlp_pallas.1} parent=39 // pred_check_branch
          %892 = sbr.rel (%p890) target = $region44
        $region43: #{mlp_pallas.1} parent=39 // pred_region
          %s893 = smul.u32 2, %s19
          %s895 = ssub.s32 512, 512
          %896 = vsyncadd %s886, %s895
          %s897 = smul.addr %s893, 2
          %s898 = smul.addr %s897, 128
          %s899 = scalar_lea.hbm %s5, %s898
          %s900 = sshll.u32 %s889, 4
          %s901 = int_to_ptr.vmem [resolvable:$true] %s900
          %906 = dma.vmem_to_hbm [thread:$0]  %s901, 512, %s899, %s886, 256, 256, 16
        $region44: #{mlp_pallas.1} parent=39 // pred_fallthru
          _
      $region40: #{mlp_pallas.1} parent=5 // pred_fallthru
        _
      %p907 = scmp.le.s32.totalorder 2, %s14
      // Predicated region
      $region45: #{mlp_pallas.1} parent=5 // pred_check
        %p908 = pneg %p907
      $region46: #{mlp_pallas.1} parent=5 // pred_check_branch
        %910 = sbr.rel (%p908) target = $region48
      $region47: #{mlp_pallas.1} parent=5 // pred_region
        %s911 = ssub.s32 %s14, 2
        // Predicated region
        $region49: #{mlp_pallas.1} parent=47 // pred_check
          %p912 = pneg %p153
        $region50: #{mlp_pallas.1} parent=47 // pred_check_branch
          %914 = sbr.rel (%p912) target = $region52
        $region51: #{mlp_pallas.1} parent=47 // pred_region
          %s915 = sand.u32 %s138, 1
          %s916 = scalar_lea.sflag [#allocation3], %s915
          %s917 = sand.u32 %s138, 1
          %s918 = smul.addr %s917, 32
          %s919 = scalar_lea.vmem [#allocation2], %s918
          %920 = dma.done %s916, 512
        $region52: #{mlp_pallas.1} parent=47 // pred_fallthru
          _
      $region48: #{mlp_pallas.1} parent=5 // pred_fallthru
        _
    $region6: #{mlp_pallas.1} parent=1 // loop_footer
      %s18 = sadd.s32 1, %s14
    $region7: #{mlp_pallas.1} parent=1 // loop_footer_branch
      %13 = sbr.rel target = $region3
    $region8: #{mlp_pallas.1} parent=1 // loop_exit
      _
    %921 = vsyncpa [#allocation3], 1
    %s922 = scalar_lea.sflag [#allocation3], 1
    %923 = vsyncpa %s922, 1

</llo_original>
